<compile_context>
chip_gen: v7x
topology: tpu7x:2x2x1
jax: 0.10.0
libtpu: 0.0.40
codegen_flags: <defaults>
</compile_context>

<pallas_src>
import jax
import jax.numpy as jnp
from jax.experimental import pallas as pl
from jax.experimental.pallas import tpu as pltpu


def _round_up(x, m):
    return (x + m - 1) // m * m


def image_only_kernel(feat_ref, w1_ref, b1_ref, w2_ref, b2_ref, out_ref):
    # feat_ref: (TB, 512)  bf16      w1_ref: (512, Hp) bf16   b1_ref: (1, Hp) f32
    # w2_ref:   (Hp, Cp)   bf16      b2_ref: (1, Cp)   f32    out_ref: (TB, Cp) f32
    h = jnp.dot(feat_ref[...], w1_ref[...], preferred_element_type=jnp.float32)
    y = jnp.tanh(h + b1_ref[...])                       # f32 elementwise (EUP tanh)
    logits = jnp.dot(y.astype(jnp.bfloat16), w2_ref[...],
                     preferred_element_type=jnp.float32)
    out_ref[...] = logits + b2_ref[...]


def image_only_forward(feat, params):
    """feat: (B, 512) resnet18 features.  params: w1 (512,H), b1 (H,), w2 (H,C), b2 (C,)."""
    B, fdim = feat.shape
    w1, b1, w2, b2 = params["w1"], params["b1"], params["w2"], params["b2"]
    H = w1.shape[1]
    C = w2.shape[1]
    Hp = _round_up(H, 128)   # lane-dense hidden width
    Cp = _round_up(C, 128)   # lane-dense logits width

    # Zero-padding keeps results bit-identical after slicing:
    # padded hidden lanes: tanh(0 + 0) = 0, so they contribute nothing to logits.
    w1p = jnp.pad(w1, ((0, 0), (0, Hp - H))).astype(jnp.bfloat16)
    b1p = jnp.pad(b1.reshape(1, -1), ((0, 0), (0, Hp - H))).astype(jnp.float32)
    w2p = jnp.pad(w2, ((0, Hp - H), (0, Cp - C))).astype(jnp.bfloat16)
    b2p = jnp.pad(b2.reshape(1, -1), ((0, 0), (0, Cp - C))).astype(jnp.float32)
    feat_bf = feat.astype(jnp.bfloat16)

    # Batch tile: full batch if small (block == full dim satisfies the (8,128) rule),
    # otherwise 128-row tiles (multiple of 8); weights stay VMEM-resident across tiles.
    TB = B if B <= 128 else 128
    grid = (pl.cdiv(B, TB),)

    cost = pl.CostEstimate(
        flops=2 * B * (fdim * Hp + Hp * Cp),
        transcendentals=B * Hp,
        bytes_accessed=(feat_bf.size * 2 + w1p.size * 2 + w2p.size * 2
                        + b1p.size * 4 + b2p.size * 4 + B * Cp * 4),
    )

    out_padded = pl.pallas_call(
        image_only_kernel,
        out_shape=jax.ShapeDtypeStruct((B, Cp), jnp.float32),
        grid=grid,
        in_specs=[
            pl.BlockSpec((TB, fdim), lambda b: (b, 0)),   # streamed per batch tile
            pl.BlockSpec((fdim, Hp), lambda b: (0, 0)),   # resident weights
            pl.BlockSpec((1, Hp), lambda b: (0, 0)),
            pl.BlockSpec((Hp, Cp), lambda b: (0, 0)),
            pl.BlockSpec((1, Cp), lambda b: (0, 0)),
        ],
        out_specs=pl.BlockSpec((TB, Cp), lambda b: (b, 0)),
        compiler_params=pltpu.CompilerParams(
            dimension_semantics=("parallel",)),
        cost_estimate=cost,
    )(feat_bf, w1p, b1p, w2p, b2p)

    return out_padded[:, :C]


def image_only_reference(feat, p):
    """Pure-JAX f32 reference mirroring the PyTorch forward (int num_classes branch)."""
    y = jnp.tanh(feat @ p["w1"] + p["b1"])
    return y @ p["w2"] + p["b2"]


if __name__ == "__main__":
    B, HIDDEN_DIM, NUM_CLASSES = 2, 32, 3
    FEAT_DIM = 512                 # resnet18 (fc = Identity) feature width
    H = 2 * HIDDEN_DIM             # fc_img1 output width

    key = jax.random.PRNGKey(0)
    kf, k1, k2, k3, k4 = jax.random.split(key, 5)

    # TODO(synk): resnet18 backbone features synthesized here instead of running the CNN.
    feat = jax.random.normal(kf, (B, FEAT_DIM), jnp.float32)
    params = {
        "w1": jax.random.normal(k1, (FEAT_DIM, H), jnp.float32) * 0.05,
        "b1": jax.random.normal(k2, (H,), jnp.float32) * 0.05,
        "w2": jax.random.normal(k3, (H, NUM_CLASSES), jnp.float32) * 0.1,
        "b2": jax.random.normal(k4, (NUM_CLASSES,), jnp.float32) * 0.1,
    }

    logits = image_only_forward(feat, params)
    jax.block_until_ready(logits)

    ref = image_only_reference(feat, params)
    assert logits.shape == (B, NUM_CLASSES)
    # bf16 matmul inputs -> loosened tolerance vs. the f32 reference
    assert jnp.allclose(logits, ref, atol=5e-2, rtol=5e-2), (logits, ref)

    print("KERNEL_OK")
</pallas_src>

<mosaic_0001>
module attributes {stable_mosaic.version = 11 : i64} {
  func.func @image_only_kernel(%arg0: i32, %arg1: memref<2x512xbf16, #tpu.memory_space<vmem>>, %arg2: memref<512x128xbf16, #tpu.memory_space<vmem>>, %arg3: memref<1x128xf32, #tpu.memory_space<vmem>>, %arg4: memref<128x128xbf16, #tpu.memory_space<vmem>>, %arg5: memref<1x128xf32, #tpu.memory_space<vmem>>, %arg6: memref<2x128xf32, #tpu.memory_space<vmem>>) attributes {dimension_semantics = [#tpu.dimension_semantics<parallel>], iteration_bounds = array<i64: 1>, scalar_prefetch = 0 : i64, scratch_operands = 0 : i64, tpu.core_type = #tpu.core_type<tc>, window_params = [{transform_indices = @transform_0, window_bounds = array<i64: 2, 512>}, {pipeline_mode = #tpu.pipeline_mode<synchronous>, transform_indices = @transform_1, window_bounds = array<i64: 512, 128>}, {pipeline_mode = #tpu.pipeline_mode<synchronous>, transform_indices = @transform_2, window_bounds = array<i64: 1, 128>}, {pipeline_mode = #tpu.pipeline_mode<synchronous>, transform_indices = @transform_3, window_bounds = array<i64: 128, 128>}, {pipeline_mode = #tpu.pipeline_mode<synchronous>, transform_indices = @transform_4, window_bounds = array<i64: 1, 128>}, {transform_indices = @transform_5, window_bounds = array<i64: 2, 128>}]} {
    %c0 = arith.constant 0 : index
    %c0_0 = arith.constant 0 : index
    %0 = vector.load %arg1[%c0, %c0_0] : memref<2x512xbf16, #tpu.memory_space<vmem>>, vector<2x512xbf16>
    %c0_1 = arith.constant 0 : index
    %c0_2 = arith.constant 0 : index
    %1 = vector.load %arg2[%c0_1, %c0_2] : memref<512x128xbf16, #tpu.memory_space<vmem>>, vector<512x128xbf16>
    %cst = arith.constant dense<0.000000e+00> : vector<2x128xf32>
    %2 = tpu.matmul %0, %1, %cst {dimension_numbers = #tpu.dot_dimension_numbers<[1], [0], [0], [1], [0, 0, 1, 1], [], []>} : vector<2x512xbf16>, vector<512x128xbf16>, vector<2x128xf32> -> vector<2x128xf32>
    %c0_3 = arith.constant 0 : index
    %c0_4 = arith.constant 0 : index
    %3 = vector.load %arg3[%c0_3, %c0_4] : memref<1x128xf32, #tpu.memory_space<vmem>>, vector<1x128xf32>
    %4 = vector.broadcast %3 : vector<1x128xf32> to vector<2x128xf32>
    %5 = arith.addf %2, %4 : vector<2x128xf32>
    %6 = math.tanh %5 : vector<2x128xf32>
    %7 = arith.truncf %6 : vector<2x128xf32> to vector<2x128xbf16>
    %c0_5 = arith.constant 0 : index
    %c0_6 = arith.constant 0 : index
    %8 = vector.load %arg4[%c0_5, %c0_6] : memref<128x128xbf16, #tpu.memory_space<vmem>>, vector<128x128xbf16>
    %cst_7 = arith.constant dense<0.000000e+00> : vector<2x128xf32>
    %9 = tpu.matmul %7, %8, %cst_7 {dimension_numbers = #tpu.dot_dimension_numbers<[1], [0], [0], [1], [0, 0, 1, 1], [], []>} : vector<2x128xbf16>, vector<128x128xbf16>, vector<2x128xf32> -> vector<2x128xf32>
    %c0_8 = arith.constant 0 : index
    %c0_9 = arith.constant 0 : index
    %10 = vector.load %arg5[%c0_8, %c0_9] : memref<1x128xf32, #tpu.memory_space<vmem>>, vector<1x128xf32>
    %11 = vector.broadcast %10 : vector<1x128xf32> to vector<2x128xf32>
    %12 = arith.addf %9, %11 : vector<2x128xf32>
    %c0_10 = arith.constant 0 : index
    %c0_11 = arith.constant 0 : index
    %13 = vector.load %arg6[%c0_10, %c0_11] : memref<2x128xf32, #tpu.memory_space<vmem>>, vector<2x128xf32>
    tpu.vector_store %arg6[%c0_10, %c0_11], %12 {strides = array<i32>} : memref<2x128xf32, #tpu.memory_space<vmem>>, vector<2x128xf32>,
    return
  }
  func.func @transform_0(%arg0: i32) -> (i32, i32) {
    %c0_i32 = arith.constant 0 : i32
    %c0_i32_0 = arith.constant 0 : i32
    return %arg0, %c0_i32 : i32, i32
  }
  func.func @transform_1(%arg0: i32) -> (i32, i32) {
    %c0_i32 = arith.constant 0 : i32
    %c0_i32_0 = arith.constant 0 : i32
    %c0_i32_1 = arith.constant 0 : i32
    return %c0_i32, %c0_i32_0 : i32, i32
  }
  func.func @transform_2(%arg0: i32) -> (i32, i32) {
    %c0_i32 = arith.constant 0 : i32
    %c0_i32_0 = arith.constant 0 : i32
    %c0_i32_1 = arith.constant 0 : i32
    return %c0_i32, %c0_i32_0 : i32, i32
  }
  func.func @transform_3(%arg0: i32) -> (i32, i32) {
    %c0_i32 = arith.constant 0 : i32
    %c0_i32_0 = arith.constant 0 : i32
    %c0_i32_1 = arith.constant 0 : i32
    return %c0_i32, %c0_i32_0 : i32, i32
  }
  func.func @transform_4(%arg0: i32) -> (i32, i32) {
    %c0_i32 = arith.constant 0 : i32
    %c0_i32_0 = arith.constant 0 : i32
    %c0_i32_1 = arith.constant 0 : i32
    return %c0_i32, %c0_i32_0 : i32, i32
  }
  func.func @transform_5(%arg0: i32) -> (i32, i32) {
    %c0_i32 = arith.constant 0 : i32
    %c0_i32_0 = arith.constant 0 : i32
    return %arg0, %c0_i32 : i32, i32
  }
}

</mosaic_0001>

<llo_original>
// kernel: tpu_custom_call.1
$region0: #{tpu_custom_call.1}
  #allocation0 [shape = 'u32[]', space=smem, size = 0x4, offset = 0x4, fixed_abs, tag = 'smem constant byte address 0x4 - core index']
  #allocation1 [shape = 'u32[144,128]{1,0:T(1,128)}', space=vmem, size = 0x12000, scoped, tag = 'internal scratch']
  %s0 = inlined_call_operand.hbm [shape: bf16[2,512], index: 0, kind: input, shape index: {}]
  %s1 = inlined_call_operand.hbm [shape: bf16[512,128], index: 1, kind: input, shape index: {}]
  %s2 = inlined_call_operand.vmem [shape: f32[1,128], index: 2, kind: input, shape index: {}]
  %s3 = inlined_call_operand.hbm [shape: bf16[128,128], index: 3, kind: input, shape index: {}]
  %s4 = inlined_call_operand.vmem [shape: f32[1,128], index: 4, kind: input, shape index: {}]
  %s5 = inlined_call_operand.hbm [shape: f32[2,128], index: 5, kind: output, shape index: {}]
  %s6 = sld [smem:[#allocation0]]
  $region42: #{tpu_custom_call.1} parent=0
    _
  %s8 = ssub.s32 1, %s6
  %s9 = scalar_select 0, %s8, %s6
  $region1: #{tpu_custom_call.1} parent=0
    #allocation2 [shape = 'u8[2048]{0}', space=vmem, size = 0x800, scoped, tag = 'input window, operand 0, single buffered']
    #allocation3 [shape = 's32[1]{0}', space=sflag, size = 0x4, scoped, tag = 'scoped memory for tpu_custom_call.1']
    #allocation4 [shape = 's32[1]{0}', space=sflag, size = 0x4, scoped, tag = 'scoped memory for tpu_custom_call.1']
    #allocation5 [shape = 'u8[131072]{0}', space=vmem, size = 0x20000, scoped, tag = 'input window, operand 1, single buffered']
    #allocation6 [shape = 's32[1]{0}', space=sflag, size = 0x4, scoped, tag = 'scoped memory for tpu_custom_call.1']
    #allocation7 [shape = 'u8[32768]{0}', space=vmem, size = 0x8000, scoped, tag = 'input window, operand 3, single buffered']
    #allocation8 [shape = 'u8[1024]{0}', space=vmem, size = 0x400, scoped, tag = 'output window, operand 0, single buffered']
    %10 = vsyncpa [#allocation3], 0
    %11 = vsyncpa [#allocation6], 0
    %12 = vsyncpa [#allocation4], 0
    // Predicated region
    $region2: #{tpu_custom_call.1} parent=1 // pred_check
      _
    $region3: #{tpu_custom_call.1} parent=1 // pred_check_branch
      %14 = sbr.rel (0) target = $region5
    $region4: #{tpu_custom_call.1} parent=1 // pred_region
      %s16 = ssub.s32 64, 64
      %17 = vsyncadd [#allocation3], %s16
      %s19 = sshll.u32 [#allocation2], 4
      %s20 = int_to_ptr.vmem [resolvable:$true] %s19
      %22 = dma.hbm_to_vmem [thread:$0]  %s0, 64, %s20, [#allocation3]
    $region5: #{tpu_custom_call.1} parent=1 // pred_fallthru
      _
    // Predicated region
    $region6: #{tpu_custom_call.1} parent=1 // pred_check
      _
    $region7: #{tpu_custom_call.1} parent=1 // pred_check_branch
      %24 = sbr.rel (0) target = $region9
    $region8: #{tpu_custom_call.1} parent=1 // pred_region
      %s26 = ssub.s32 4096, 4096
      %27 = vsyncadd [#allocation6], %s26
      %s28 = sshll.u32 [#allocation5], 4
      %s29 = int_to_ptr.vmem [resolvable:$true] %s28
      %34 = dma.hbm_to_vmem [thread:$0]  %s1, 4096, %s29, [#allocation6], 64, 64, 4
    $region9: #{tpu_custom_call.1} parent=1 // pred_fallthru
      _
    // Predicated region
    $region10: #{tpu_custom_call.1} parent=1 // pred_check
      _
    $region11: #{tpu_custom_call.1} parent=1 // pred_check_branch
      %36 = sbr.rel (0) target = $region13
    $region12: #{tpu_custom_call.1} parent=1 // pred_region
      _
    $region13: #{tpu_custom_call.1} parent=1 // pred_fallthru
      _
    // Predicated region
    $region14: #{tpu_custom_call.1} parent=1 // pred_check
      _
    $region15: #{tpu_custom_call.1} parent=1 // pred_check_branch
      %38 = sbr.rel (0) target = $region17
    $region16: #{tpu_custom_call.1} parent=1 // pred_region
      %s40 = ssub.s32 1024, 1024
      %41 = vsyncadd [#allocation6], %s40
      %s42 = sshll.u32 [#allocation7], 4
      %s43 = int_to_ptr.vmem [resolvable:$true] %s42
      %48 = dma.hbm_to_vmem [thread:$0]  %s3, 1024, %s43, [#allocation6], 64, 64, 4
    $region17: #{tpu_custom_call.1} parent=1 // pred_fallthru
      _
    // Predicated region
    $region18: #{tpu_custom_call.1} parent=1 // pred_check
      _
    $region19: #{tpu_custom_call.1} parent=1 // pred_check_branch
      %50 = sbr.rel (0) target = $region21
    $region20: #{tpu_custom_call.1} parent=1 // pred_region
      _
    $region21: #{tpu_custom_call.1} parent=1 // pred_fallthru
      _
    // Predicated region
    $region22: #{tpu_custom_call.1} parent=1 // pred_check
      _
    $region23: #{tpu_custom_call.1} parent=1 // pred_check_branch
      %52 = sbr.rel (0) target = $region25
    $region24: #{tpu_custom_call.1} parent=1 // pred_region
      %53 = dma.done [#allocation3], 64
    $region25: #{tpu_custom_call.1} parent=1 // pred_fallthru
      _
    // Predicated region
    $region26: #{tpu_custom_call.1} parent=1 // pred_check
      _
    $region27: #{tpu_custom_call.1} parent=1 // pred_check_branch
      %55 = sbr.rel (0) target = $region29
    $region28: #{tpu_custom_call.1} parent=1 // pred_region
      %56 = dma.done [#allocation6], 4096
    $region29: #{tpu_custom_call.1} parent=1 // pred_fallthru
      _
    // Predicated region
    $region30: #{tpu_custom_call.1} parent=1 // pred_check
      _
    $region31: #{tpu_custom_call.1} parent=1 // pred_check_branch
      %58 = sbr.rel (0) target = $region33
    $region32: #{tpu_custom_call.1} parent=1 // pred_region
      %59 = dma.done [#allocation6], 1024
    $region33: #{tpu_custom_call.1} parent=1 // pred_fallthru
      _
    %v61 = vld [vmem:[#allocation2] sm:$0xf]
    %v62 = vld [vmem:[#allocation5] sm:$0xf]
    %v63 = vld [vmem:[#allocation5 + $0x4] sm:$0xf]
    %v64 = vld [vmem:[#allocation5 + $0x8] sm:$0xf]
    %v65 = vld [vmem:[#allocation5 + $0xc] sm:$0xf]
    %v66 = vld [vmem:[#allocation5 + $0x10] sm:$0xf]
    %v67 = vld [vmem:[#allocation5 + $0x14] sm:$0xf]
    %v68 = vld [vmem:[#allocation5 + $0x18] sm:$0xf]
    %v69 = vld [vmem:[#allocation5 + $0x1c] sm:$0xf]
    %v70 = vld [vmem:[#allocation5 + $0x20] sm:$0xf]
    %v71 = vld [vmem:[#allocation5 + $0x24] sm:$0xf]
    %v72 = vld [vmem:[#allocation5 + $0x28] sm:$0xf]
    %v73 = vld [vmem:[#allocation5 + $0x2c] sm:$0xf]
    %v74 = vld [vmem:[#allocation5 + $0x30] sm:$0xf]
    %v75 = vld [vmem:[#allocation5 + $0x34] sm:$0xf]
    %v76 = vld [vmem:[#allocation5 + $0x38] sm:$0xf]
    %v77 = vld [vmem:[#allocation5 + $0x3c] sm:$0xf]
    %v78 = vld [vmem:[#allocation5 + $0x40] sm:$0xf]
    %v79 = vld [vmem:[#allocation5 + $0x44] sm:$0xf]
    %v80 = vld [vmem:[#allocation5 + $0x48] sm:$0xf]
    %v81 = vld [vmem:[#allocation5 + $0x4c] sm:$0xf]
    %v82 = vld [vmem:[#allocation5 + $0x50] sm:$0xf]
    %v83 = vld [vmem:[#allocation5 + $0x54] sm:$0xf]
    %v84 = vld [vmem:[#allocation5 + $0x58] sm:$0xf]
    %v85 = vld [vmem:[#allocation5 + $0x5c] sm:$0xf]
    %v86 = vld [vmem:[#allocation5 + $0x60] sm:$0xf]
    %v87 = vld [vmem:[#allocation5 + $0x64] sm:$0xf]
    %v88 = vld [vmem:[#allocation5 + $0x68] sm:$0xf]
    %v89 = vld [vmem:[#allocation5 + $0x6c] sm:$0xf]
    %v90 = vld [vmem:[#allocation5 + $0x70] sm:$0xf]
    %v91 = vld [vmem:[#allocation5 + $0x74] sm:$0xf]
    %v92 = vld [vmem:[#allocation5 + $0x78] sm:$0xf]
    %v93 = vld [vmem:[#allocation5 + $0x7c] sm:$0xf]
    %v94 = vld [vmem:[#allocation5 + $0x80] sm:$0xf]
    %v95 = vld [vmem:[#allocation5 + $0x84] sm:$0xf]
    %v96 = vld [vmem:[#allocation5 + $0x88] sm:$0xf]
    %v97 = vld [vmem:[#allocation5 + $0x8c] sm:$0xf]
    %v98 = vld [vmem:[#allocation5 + $0x90] sm:$0xf]
    %v99 = vld [vmem:[#allocation5 + $0x94] sm:$0xf]
    %v100 = vld [vmem:[#allocation5 + $0x98] sm:$0xf]
    %v101 = vld [vmem:[#allocation5 + $0x9c] sm:$0xf]
    %v102 = vld [vmem:[#allocation5 + $0xa0] sm:$0xf]
    %v103 = vld [vmem:[#allocation5 + $0xa4] sm:$0xf]
    %v104 = vld [vmem:[#allocation5 + $0xa8] sm:$0xf]
    %v105 = vld [vmem:[#allocation5 + $0xac] sm:$0xf]
    %v106 = vld [vmem:[#allocation5 + $0xb0] sm:$0xf]
    %v107 = vld [vmem:[#allocation5 + $0xb4] sm:$0xf]
    %v108 = vld [vmem:[#allocation5 + $0xb8] sm:$0xf]
    %v109 = vld [vmem:[#allocation5 + $0xbc] sm:$0xf]
    %v110 = vld [vmem:[#allocation5 + $0xc0] sm:$0xf]
    %v111 = vld [vmem:[#allocation5 + $0xc4] sm:$0xf]
    %v112 = vld [vmem:[#allocation5 + $0xc8] sm:$0xf]
    %v113 = vld [vmem:[#allocation5 + $0xcc] sm:$0xf]
    %v114 = vld [vmem:[#allocation5 + $0xd0] sm:$0xf]
    %v115 = vld [vmem:[#allocation5 + $0xd4] sm:$0xf]
    %v116 = vld [vmem:[#allocation5 + $0xd8] sm:$0xf]
    %v117 = vld [vmem:[#allocation5 + $0xdc] sm:$0xf]
    %v118 = vld [vmem:[#allocation5 + $0xe0] sm:$0xf]
    %v119 = vld [vmem:[#allocation5 + $0xe4] sm:$0xf]
    %v120 = vld [vmem:[#allocation5 + $0xe8] sm:$0xf]
    %v121 = vld [vmem:[#allocation5 + $0xec] sm:$0xf]
    %v122 = vld [vmem:[#allocation5 + $0xf0] sm:$0xf]
    %v123 = vld [vmem:[#allocation5 + $0xf4] sm:$0xf]
    %v124 = vld [vmem:[#allocation5 + $0xf8] sm:$0xf]
    %v125 = vld [vmem:[#allocation5 + $0xfc] sm:$0xf]
    %v126 = vld [vmem:[%s2] sm:$0x1]
    %v128 = vlaneseq
    %v129 = vshrl.u32 %v128, 7
    %v130 = vsub.s32 0, %v129
    %v131 = vrot.slane %v126, %v130
    %v135 = vunpack.c.l.s4 1966171168
    %v136 = vunpack.c.0.s8 %v135
    %v137 = vlaneseq
    %v138 = vshrl.u32 %v137, 7
    %v139 = vsub.s32 %v136, %v138
    %v140 = vrot.slane %v61, %v139
    %v141 = vcombine.high %v140, %v140
    %v143 = vunpack.c.l.s4 1966171168
    %v144 = vunpack.c.0.s8 %v143
    %v145 = vlaneseq
    %v146 = vshrl.u32 %v145, 7
    %v147 = vsub.s32 %v144, %v146
    %v148 = vrot.slane %v140, %v147
    %v150 = vunpack.c.l.s4 1966171168
    %v151 = vunpack.c.0.s8 %v150
    %v152 = vlaneseq
    %v153 = vshrl.u32 %v152, 7
    %v154 = vsub.s32 %v151, %v153
    %v155 = vrot.slane %v141, %v154
    %v156 = vcombine.high %v148, %v148
    %v157 = vcombine.high %v155, %v155
    %v226 = vunpack.c.l.b16 %v62
    %v227 = vunpack.c.l.b16 %v63
    %v228 = vunpack.c.l.b16 %v64
    %v229 = vunpack.c.l.b16 %v65
    %v230 = vunpack.c.l.b16 %v66
    %v231 = vunpack.c.l.b16 %v67
    %v232 = vunpack.c.l.b16 %v68
    %v233 = vunpack.c.l.b16 %v69
    %v234 = vunpack.c.l.b16 %v70
    %v235 = vunpack.c.l.b16 %v71
    %v236 = vunpack.c.l.b16 %v72
    %v237 = vunpack.c.l.b16 %v73
    %v238 = vunpack.c.l.b16 %v74
    %v239 = vunpack.c.l.b16 %v75
    %v240 = vunpack.c.l.b16 %v76
    %v241 = vunpack.c.l.b16 %v77
    %v242 = vunpack.c.l.b16 %v78
    %v243 = vunpack.c.l.b16 %v79
    %v244 = vunpack.c.l.b16 %v80
    %v245 = vunpack.c.l.b16 %v81
    %v246 = vunpack.c.l.b16 %v82
    %v247 = vunpack.c.l.b16 %v83
    %v248 = vunpack.c.l.b16 %v84
    %v249 = vunpack.c.l.b16 %v85
    %v250 = vunpack.c.l.b16 %v86
    %v251 = vunpack.c.l.b16 %v87
    %v252 = vunpack.c.l.b16 %v88
    %v253 = vunpack.c.l.b16 %v89
    %v254 = vunpack.c.l.b16 %v90
    %v255 = vunpack.c.l.b16 %v91
    %v256 = vunpack.c.l.b16 %v92
    %v257 = vunpack.c.l.b16 %v93
    %v258 = vunpack.c.l.b16 %v94
    %v259 = vunpack.c.l.b16 %v95
    %v260 = vunpack.c.l.b16 %v96
    %v261 = vunpack.c.l.b16 %v97
    %v262 = vunpack.c.l.b16 %v98
    %v263 = vunpack.c.l.b16 %v99
    %v264 = vunpack.c.l.b16 %v100
    %v265 = vunpack.c.l.b16 %v101
    %v266 = vunpack.c.l.b16 %v102
    %v267 = vunpack.c.l.b16 %v103
    %v268 = vunpack.c.l.b16 %v104
    %v269 = vunpack.c.l.b16 %v105
    %v270 = vunpack.c.l.b16 %v106
    %v271 = vunpack.c.l.b16 %v107
    %v272 = vunpack.c.l.b16 %v108
    %v273 = vunpack.c.l.b16 %v109
    %v274 = vunpack.c.l.b16 %v110
    %v275 = vunpack.c.l.b16 %v111
    %v276 = vunpack.c.l.b16 %v112
    %v277 = vunpack.c.l.b16 %v113
    %v278 = vunpack.c.l.b16 %v114
    %v279 = vunpack.c.l.b16 %v115
    %v280 = vunpack.c.l.b16 %v116
    %v281 = vunpack.c.l.b16 %v117
    %v282 = vunpack.c.l.b16 %v118
    %v283 = vunpack.c.l.b16 %v119
    %v284 = vunpack.c.l.b16 %v120
    %v285 = vunpack.c.l.b16 %v121
    %v286 = vunpack.c.l.b16 %v122
    %v287 = vunpack.c.l.b16 %v123
    %v288 = vunpack.c.l.b16 %v124
    %v289 = vunpack.c.l.b16 %v125
    %v290 = vpack.c.b16 %v227, %v226
    %v291 = vpack.c.b16 %v229, %v228
    %v292 = vpack.c.b16 %v231, %v230
    %v293 = vpack.c.b16 %v233, %v232
    %v294 = vpack.c.b16 %v235, %v234
    %v295 = vpack.c.b16 %v237, %v236
    %v296 = vpack.c.b16 %v239, %v238
    %v297 = vpack.c.b16 %v241, %v240
    %v298 = vpack.c.b16 %v243, %v242
    %v299 = vpack.c.b16 %v245, %v244
    %v300 = vpack.c.b16 %v247, %v246
    %v301 = vpack.c.b16 %v249, %v248
    %v302 = vpack.c.b16 %v251, %v250
    %v303 = vpack.c.b16 %v253, %v252
    %v304 = vpack.c.b16 %v255, %v254
    %v305 = vpack.c.b16 %v257, %v256
    %v306 = vpack.c.b16 %v259, %v258
    %v307 = vpack.c.b16 %v261, %v260
    %v308 = vpack.c.b16 %v263, %v262
    %v309 = vpack.c.b16 %v265, %v264
    %v310 = vpack.c.b16 %v267, %v266
    %v311 = vpack.c.b16 %v269, %v268
    %v312 = vpack.c.b16 %v271, %v270
    %v313 = vpack.c.b16 %v273, %v272
    %v314 = vpack.c.b16 %v275, %v274
    %v315 = vpack.c.b16 %v277, %v276
    %v316 = vpack.c.b16 %v279, %v278
    %v317 = vpack.c.b16 %v281, %v280
    %v318 = vpack.c.b16 %v283, %v282
    %v319 = vpack.c.b16 %v285, %v284
    %v320 = vpack.c.b16 %v287, %v286
    %v321 = vpack.c.b16 %v289, %v288
    %354 = vmatprep.subr.bf16.mxu0 0
    %355 = vmatpush1.bf16.msra.mxu0 %v290
    %356 = vmatprep.subr.bf16.mxu0 0
    %357 = vmatpush1.bf16.msra.mxu0 %v291
    %358 = vmatprep.subr.bf16.mxu0 0
    %359 = vmatpush1.bf16.msra.mxu0 %v292
    %360 = vmatprep.subr.bf16.mxu0 0
    %361 = vmatpush1.bf16.msra.mxu0 %v293
    %362 = vmatprep.subr.bf16.mxu0 0
    %363 = vmatpush1.bf16.msra.mxu0 %v294
    %364 = vmatprep.subr.bf16.mxu0 0
    %365 = vmatpush1.bf16.msra.mxu0 %v295
    %366 = vmatprep.subr.bf16.mxu0 0
    %367 = vmatpush1.bf16.msra.mxu0 %v296
    %368 = vmatprep.subr.bf16.mxu0 0
    %369 = vmatpush1.bf16.msra.mxu0 %v297
    %370 = vmatprep.subr.bf16.mxu0 0
    %371 = vmatpush1.bf16.msra.mxu0 %v298
    %372 = vmatprep.subr.bf16.mxu0 0
    %373 = vmatpush1.bf16.msra.mxu0 %v299
    %374 = vmatprep.subr.bf16.mxu0 0
    %375 = vmatpush1.bf16.msra.mxu0 %v300
    %376 = vmatprep.subr.bf16.mxu0 0
    %377 = vmatpush1.bf16.msra.mxu0 %v301
    %378 = vmatprep.subr.bf16.mxu0 0
    %379 = vmatpush1.bf16.msra.mxu0 %v302
    %380 = vmatprep.subr.bf16.mxu0 0
    %381 = vmatpush1.bf16.msra.mxu0 %v303
    %382 = vmatprep.subr.bf16.mxu0 0
    %383 = vmatpush1.bf16.msra.mxu0 %v304
    %384 = vmatprep.subr.bf16.mxu0 0
    %385 = vmatpush1.bf16.msra.mxu0 %v305
    %386 = vmatprep.mubr.bf16.mxu0 %v155
    %387 = vmatmul.mubr.bf16.gmra.mrb[0].mxu0 %v148
    %v388 = vpop.f32.mrb[0].mxu0
    %v389 = vadd.f32 %v131, %v388
    %v390 = vpop.f32.mrb[0].mxu0
    %v391 = vpop.f32.mrb[0].mxu0
    %v392 = vpop.f32.mrb[0].mxu0
    %393 = vdwg.mxu0
    %394 = vmatprep.subr.bf16.mxu0 0
    %395 = vmatpush1.bf16.msra.mxu0 %v306
    %396 = vmatprep.subr.bf16.mxu0 0
    %397 = vmatpush1.bf16.msra.mxu0 %v307
    %398 = vmatprep.subr.bf16.mxu0 0
    %399 = vmatpush1.bf16.msra.mxu0 %v308
    %400 = vmatprep.subr.bf16.mxu0 0
    %401 = vmatpush1.bf16.msra.mxu0 %v309
    %402 = vmatprep.subr.bf16.mxu0 0
    %403 = vmatpush1.bf16.msra.mxu0 %v310
    %404 = vmatprep.subr.bf16.mxu0 0
    %405 = vmatpush1.bf16.msra.mxu0 %v311
    %406 = vmatprep.subr.bf16.mxu0 0
    %407 = vmatpush1.bf16.msra.mxu0 %v312
    %408 = vmatprep.subr.bf16.mxu0 0
    %409 = vmatpush1.bf16.msra.mxu0 %v313
    %410 = vmatprep.subr.bf16.mxu0 0
    %411 = vmatpush1.bf16.msra.mxu0 %v314
    %412 = vmatprep.subr.bf16.mxu0 0
    %413 = vmatpush1.bf16.msra.mxu0 %v315
    %414 = vmatprep.subr.bf16.mxu0 0
    %415 = vmatpush1.bf16.msra.mxu0 %v316
    %416 = vmatprep.subr.bf16.mxu0 0
    %417 = vmatpush1.bf16.msra.mxu0 %v317
    %418 = vmatprep.subr.bf16.mxu0 0
    %419 = vmatpush1.bf16.msra.mxu0 %v318
    %420 = vmatprep.subr.bf16.mxu0 0
    %421 = vmatpush1.bf16.msra.mxu0 %v319
    %422 = vmatprep.subr.bf16.mxu0 0
    %423 = vmatpush1.bf16.msra.mxu0 %v320
    %424 = vmatprep.subr.bf16.mxu0 0
    %425 = vmatpush1.bf16.msra.mxu0 %v321
    %426 = vmatprep.mubr.bf16.mxu0 %v157
    %427 = vmatmul.mubr.bf16.gmra.mrb[0].mxu0 %v156
    %v428 = vpop.f32.mrb[0].mxu0
    %v429 = vadd.f32 %v389, %v428
    %v430 = vpop.f32.mrb[0].mxu0
    %v431 = vpop.f32.mrb[0].mxu0
    %v432 = vpop.f32.mrb[0].mxu0
    %433 = vdwg.mxu0
    %v434 = vtanh.pop %v429
    %v435 = vpack.c.bf16 %v434, %v434
    %v436 = vld [vmem:[#allocation7] sm:$0xf]
    %v437 = vld [vmem:[#allocation7 + $0x4] sm:$0xf]
    %v438 = vld [vmem:[#allocation7 + $0x8] sm:$0xf]
    %v439 = vld [vmem:[#allocation7 + $0xc] sm:$0xf]
    %v440 = vld [vmem:[#allocation7 + $0x10] sm:$0xf]
    %v441 = vld [vmem:[#allocation7 + $0x14] sm:$0xf]
    %v442 = vld [vmem:[#allocation7 + $0x18] sm:$0xf]
    %v443 = vld [vmem:[#allocation7 + $0x1c] sm:$0xf]
    %v444 = vld [vmem:[#allocation7 + $0x20] sm:$0xf]
    %v445 = vld [vmem:[#allocation7 + $0x24] sm:$0xf]
    %v446 = vld [vmem:[#allocation7 + $0x28] sm:$0xf]
    %v447 = vld [vmem:[#allocation7 + $0x2c] sm:$0xf]
    %v448 = vld [vmem:[#allocation7 + $0x30] sm:$0xf]
    %v449 = vld [vmem:[#allocation7 + $0x34] sm:$0xf]
    %v450 = vld [vmem:[#allocation7 + $0x38] sm:$0xf]
    %v451 = vld [vmem:[#allocation7 + $0x3c] sm:$0xf]
    %v452 = vld [vmem:[%s4] sm:$0x1]
    %v454 = vlaneseq
    %v455 = vshrl.u32 %v454, 7
    %v456 = vsub.s32 0, %v455
    %v457 = vrot.slane %v452, %v456
    %v475 = vunpack.c.l.b16 %v436
    %v476 = vunpack.c.l.b16 %v437
    %v477 = vunpack.c.l.b16 %v438
    %v478 = vunpack.c.l.b16 %v439
    %v479 = vunpack.c.l.b16 %v440
    %v480 = vunpack.c.l.b16 %v441
    %v481 = vunpack.c.l.b16 %v442
    %v482 = vunpack.c.l.b16 %v443
    %v483 = vunpack.c.l.b16 %v444
    %v484 = vunpack.c.l.b16 %v445
    %v485 = vunpack.c.l.b16 %v446
    %v486 = vunpack.c.l.b16 %v447
    %v487 = vunpack.c.l.b16 %v448
    %v488 = vunpack.c.l.b16 %v449
    %v489 = vunpack.c.l.b16 %v450
    %v490 = vunpack.c.l.b16 %v451
    %v491 = vpack.c.b16 %v476, %v475
    %v492 = vpack.c.b16 %v478, %v477
    %v493 = vpack.c.b16 %v480, %v479
    %v494 = vpack.c.b16 %v482, %v481
    %v495 = vpack.c.b16 %v484, %v483
    %v496 = vpack.c.b16 %v486, %v485
    %v497 = vpack.c.b16 %v488, %v487
    %v498 = vpack.c.b16 %v490, %v489
    %507 = vmatprep.subr.bf16.mxu0 0
    %508 = vmatpush1.bf16.msra.mxu0 %v491
    %509 = vmatprep.subr.bf16.mxu0 0
    %510 = vmatpush1.bf16.msra.mxu0 %v492
    %511 = vmatprep.subr.bf16.mxu0 0
    %512 = vmatpush1.bf16.msra.mxu0 %v493
    %513 = vmatprep.subr.bf16.mxu0 0
    %514 = vmatpush1.bf16.msra.mxu0 %v494
    %515 = vmatprep.subr.bf16.mxu0 0
    %516 = vmatpush1.bf16.msra.mxu0 %v495
    %517 = vmatprep.subr.bf16.mxu0 0
    %518 = vmatpush1.bf16.msra.mxu0 %v496
    %519 = vmatprep.subr.bf16.mxu0 0
    %520 = vmatpush1.bf16.msra.mxu0 %v497
    %521 = vmatprep.subr.bf16.mxu0 0
    %522 = vmatpush1.bf16.msra.mxu0 %v498
    %523 = vmatprep.subr.bf16.mxu0 0
    %524 = vmatpush1.bf16.msra.mxu0 0
    %525 = vmatprep.subr.bf16.mxu0 0
    %526 = vmatpush1.bf16.msra.mxu0 0
    %527 = vmatprep.subr.bf16.mxu0 0
    %528 = vmatpush1.bf16.msra.mxu0 0
    %529 = vmatprep.subr.bf16.mxu0 0
    %530 = vmatpush1.bf16.msra.mxu0 0
    %531 = vmatprep.subr.bf16.mxu0 0
    %532 = vmatpush1.bf16.msra.mxu0 0
    %533 = vmatprep.subr.bf16.mxu0 0
    %534 = vmatpush1.bf16.msra.mxu0 0
    %535 = vmatprep.subr.bf16.mxu0 0
    %536 = vmatpush1.bf16.msra.mxu0 0
    %537 = vmatprep.subr.bf16.mxu0 0
    %538 = vmatpush1.bf16.msra.mxu0 0
    %539 = vmatprep.mubr.bf16.mxu0 0
    %540 = vmatmul.mubr.bf16.gmra.mrb[0].mxu0 %v435
    %v541 = vpop.f32.mrb[0].mxu0
    %v542 = vadd.f32 %v457, %v541
    %v543 = vpop.f32.mrb[0].mxu0
    %v544 = vpop.f32.mrb[0].mxu0
    %v545 = vpop.f32.mrb[0].mxu0
    %546 = vdwg.mxu0
    %547 = vst [vmem:[#allocation8] sm:$0x3] %v542
    // Predicated region
    $region34: #{tpu_custom_call.1} parent=1 // pred_check
      _
    $region35: #{tpu_custom_call.1} parent=1 // pred_check_branch
      %549 = sbr.rel (0) target = $region37
    $region36: #{tpu_custom_call.1} parent=1 // pred_region
      %s551 = ssub.s32 32, 32
      %552 = vsyncadd [#allocation4], %s551
      %s554 = sshll.u32 [#allocation8], 4
      %s555 = int_to_ptr.vmem [resolvable:$true] %s554
      %557 = dma.vmem_to_hbm [thread:$0]  %s555, 32, %s5, [#allocation4]
    $region37: #{tpu_custom_call.1} parent=1 // pred_fallthru
      _
    // Predicated region
    $region38: #{tpu_custom_call.1} parent=1 // pred_check
      _
    $region39: #{tpu_custom_call.1} parent=1 // pred_check_branch
      %559 = sbr.rel (0) target = $region41
    $region40: #{tpu_custom_call.1} parent=1 // pred_region
      %560 = dma.done [#allocation4], 32
    $region41: #{tpu_custom_call.1} parent=1 // pred_fallthru
      _
    %561 = vsyncpa [#allocation3], 1
    %562 = vsyncpa [#allocation6], 1
    %563 = vsyncpa [#allocation4], 1

</llo_original>
